<compile_context>
chip_gen: v6e
topology: v6e:2x2x1
jax: 0.10.0
libtpu: 0.0.40
codegen_flags: <defaults>
</compile_context>

<pallas_src>
import functools

import jax
import jax.numpy as jnp
from jax.experimental import pallas as pl
from jax.experimental.pallas import tpu as pltpu

NEG_BIG = -1e30  # bias for padded vocab columns: exp(logit - max) underflows to 0


def _round_up(x, m):
    return (x + m - 1) // m * m


def _cbow_kernel(ctx_ref, w_ref, b_ref, out_ref, embeds_sc, m_sc, l_sc, *,
                 nv, tile_v):
    """grid = (num_batch_tiles, num_v_tiles); axis 1 sweeps the vocab tiles.

    ctx_ref : (tb, C, D_pad) f32   gathered context rows (resident per batch tile)
    w_ref   : (tile_v, D_pad)      linear weight tile (streamed; bf16 or f32)
    b_ref   : (1, V_pad) f32       bias, resident (padded columns = NEG_BIG)
    out_ref : (tb, V_pad) f32      resident output block (accumulator pattern)
    """
    j = pl.program_id(1)

    @pl.when(j == 0)
    def _init():
        # torch.sum(embeddings(inputs), dim=1): sum the C context rows in f32.
        embeds_sc[...] = jnp.sum(ctx_ref[...], axis=1)
        m_sc[...] = jnp.full(m_sc.shape, NEG_BIG, dtype=jnp.float32)
        l_sc[...] = jnp.zeros(l_sc.shape, dtype=jnp.float32)

    # Linear tile: contract dim 1 of embeds (tb, D) with dim 1 of w (tile_v, D)
    # -> (tb, tile_v).  No transpose; f32 accumulation on the MXU.
    logits = jax.lax.dot_general(
        embeds_sc[...].astype(w_ref.dtype), w_ref[...],
        dimension_numbers=(((1,), (1,)), ((), ())),
        preferred_element_type=jnp.float32)

    off = pl.multiple_of(j * tile_v, 128)
    logits = logits + b_ref[:, pl.ds(off, tile_v)]

    # Raw logits go straight into the resident output block (128-aligned,
    # lane-dense dynamic slice) -- no separate logits scratch.
    out_ref[:, pl.ds(off, tile_v)] = logits

    # Online logsumexp across the vocab tiles (flash-attention style).
    m_new = jnp.maximum(m_sc[...], jnp.max(logits, axis=1, keepdims=True))
    l_sc[...] = (l_sc[...] * jnp.exp(m_sc[...] - m_new)
                 + jnp.sum(jnp.exp(logits - m_new), axis=1, keepdims=True))
    m_sc[...] = m_new

    @pl.when(j == nv - 1)
    def _finalize():
        lse = m_sc[...] + jnp.log(l_sc[...])          # (tb, 1)
        out_ref[...] = out_ref[...] - lse             # log_softmax, in place


def _vmem_bytes_estimate(tb, c, d_pad, tile_v, v_pad, w_itemsize):
    """Rough VMEM budget (double-buffered blocks + scratch), (8,128)-padded."""
    c_mem = _round_up(c, 8)
    ctx = 2 * tb * c_mem * d_pad * 4
    w = 2 * tile_v * d_pad * w_itemsize
    bias = 2 * 8 * v_pad * 4
    out = 2 * tb * v_pad * 4
    scratch = tb * d_pad * 4 + 2 * tb * 128 * 4
    return ctx + w + bias + out + scratch


def cbow_forward(ids, emb, w, b, *, tile_v=512, tile_b=256,
                 weight_dtype=jnp.bfloat16, min_batch_tiles=1):
    """ids: (B, C) int; emb: (V, D); w: (V, D) torch Linear layout; b: (V,).

    weight_dtype=jnp.bfloat16 halves the streamed-weight HBM traffic (f32 MXU
    accumulation kept); use jnp.float32 for exact parity with the reference.
    min_batch_tiles=2 keeps both v7x TensorCores busy for small batches.
    """
    B, C = ids.shape
    V, D = emb.shape
    assert w.shape == (V, D) and b.shape == (V,)
    assert tile_v % 128 == 0 and tile_b % 8 == 0

    v_pad = _round_up(V, tile_v)
    d_pad = _round_up(D, 128)
    nv = v_pad // tile_v

    tb = min(tile_b, _round_up(B, 8))
    b_pad_rows = _round_up(B, tb)
    nb = b_pad_rows // tb
    # Megacore occupancy: split the 'parallel' batch axis if it has one tile.
    while nb < min_batch_tiles and tb > 8:
        tb = _round_up(tb // 2, 8)
        b_pad_rows = _round_up(B, tb)
        nb = b_pad_rows // tb

    # ---- wrapper-side prep (cheap copies / tiny gather) ---------------------
    # Embedding row lookup as a small XLA gather (review option (a)); the
    # context sum happens inside the kernel.
    # TODO(synk): for a fully fused variant at very large vocab, replace this
    # gather with scalar-prefetched ids in SMEM + per-row DMA gather from an
    # embedding ref in memory_space=pl.ANY.
    emb_p = jnp.zeros((V, d_pad), jnp.float32).at[:, :D].set(emb.astype(jnp.float32))
    ctx = jnp.take(emb_p, ids.astype(jnp.int32), axis=0)          # (B, C, d_pad)
    ctx_p = jnp.zeros((b_pad_rows, C, d_pad), jnp.float32).at[:B].set(ctx)

    w_p = jnp.zeros((v_pad, d_pad), weight_dtype).at[:V, :D].set(w.astype(weight_dtype))
    bias_p = jnp.full((1, v_pad), NEG_BIG, jnp.float32).at[0, :V].set(b.astype(jnp.float32))

    vmem_limit = int(min(
        max(_vmem_bytes_estimate(tb, C, d_pad, tile_v, v_pad,
                                 jnp.dtype(weight_dtype).itemsize) + (8 << 20),
            32 << 20),
        112 << 20))

    kernel = functools.partial(_cbow_kernel, nv=nv, tile_v=tile_v)

    out = pl.pallas_call(
        kernel,
        out_shape=jax.ShapeDtypeStruct((b_pad_rows, v_pad), jnp.float32),
        grid_spec=pltpu.PrefetchScalarGridSpec(
            num_scalar_prefetch=0,
            grid=(nb, nv),
            in_specs=[
                # Gathered context rows: resident across the V sweep.
                pl.BlockSpec((tb, C, d_pad), lambda bi, j: (bi, 0, 0)),
                # Linear weight: streamed V tiles (double-buffered by Pallas).
                pl.BlockSpec((tile_v, d_pad), lambda bi, j: (j, 0)),
                # Bias: one resident (1, V_pad) block, sliced in-kernel.
                pl.BlockSpec((1, v_pad), lambda bi, j: (0, 0)),
            ],
            # Output block is resident across the V sweep (accumulator),
            # written lane-dense tile by tile and normalized on the last tile.
            out_specs=pl.BlockSpec((tb, v_pad), lambda bi, j: (bi, 0)),
            scratch_shapes=[
                pltpu.VMEM((tb, d_pad), jnp.float32),   # summed context embeds
                pltpu.VMEM((tb, 1), jnp.float32),       # running max
                pltpu.VMEM((tb, 1), jnp.float32),       # running sum-exp
            ]),
        compiler_params=pltpu.CompilerParams(
            dimension_semantics=("parallel", "arbitrary"),
            vmem_limit_bytes=vmem_limit),
    )(ctx_p, w_p, bias_p)

    return out[:B, :V]


def cbow_reference(ids, emb, w, b):
    embeds = jnp.sum(emb[ids], axis=1)            # (B, D)
    logits = embeds @ w.T + b                     # (B, V)
    return jax.nn.log_softmax(logits, axis=1)


if __name__ == "__main__":
    vocab_size = 200       # pads to 256/512 depending on tile_v
    embedding_dim = 48     # pads to 128
    batch = 16
    context = 4

    key = jax.random.PRNGKey(0)
    k_ids, k_emb, k_w, k_b = jax.random.split(key, 4)

    ids = jax.random.randint(k_ids, (batch, context), 0, vocab_size, dtype=jnp.int32)
    emb = jax.random.normal(k_emb, (vocab_size, embedding_dim), dtype=jnp.float32)
    w = jax.random.normal(k_w, (vocab_size, embedding_dim), dtype=jnp.float32) * 0.1
    b = jax.random.normal(k_b, (vocab_size,), dtype=jnp.float32) * 0.1

    ref = cbow_reference(ids, emb, w, b)

    # 1) Performance defaults: bf16-streamed weight, big V tile, batch axis
    #    split into 2 tiles for v7x megacore occupancy. bf16 streaming relaxes
    #    exact f32 parity (~1e-2 expected), so use a loose tolerance.
    out_bf16 = cbow_forward(ids, emb, w, b, min_batch_tiles=2)
    jax.block_until_ready(out_bf16)
    assert out_bf16.shape == (batch, vocab_size)
    assert jnp.allclose(out_bf16, ref, atol=1e-1), \
        float(jnp.max(jnp.abs(out_bf16 - ref)))

    # 2) Exact f32 path with small tiles: exercises the streamed multi-V-tile
    #    online logsumexp and the multi-batch-tile 'parallel' axis.
    out_f32 = cbow_forward(ids, emb, w, b, tile_v=128, tile_b=8,
                           weight_dtype=jnp.float32)
    jax.block_until_ready(out_f32)
    assert out_f32.shape == (batch, vocab_size)
    assert jnp.allclose(out_f32, ref, atol=1e-4, rtol=1e-4), \
        float(jnp.max(jnp.abs(out_f32 - ref)))

    print("KERNEL_OK")
</pallas_src>

<mosaic_0001>
module attributes {stable_mosaic.version = 11 : i64} {
  func.func @_cbow_kernel(%arg0: i32, %arg1: i32, %arg2: memref<8x4x128xf32, #tpu.memory_space<vmem>>, %arg3: memref<512x128xbf16, #tpu.memory_space<vmem>>, %arg4: memref<1x512xf32, #tpu.memory_space<vmem>>, %arg5: memref<8x512xf32, #tpu.memory_space<vmem>>, %arg6: memref<8x128xf32, #tpu.memory_space<vmem>>, %arg7: memref<8x1xf32, #tpu.memory_space<vmem>>, %arg8: memref<8x1xf32, #tpu.memory_space<vmem>>) attributes {dimension_semantics = [#tpu.dimension_semantics<parallel>, #tpu.dimension_semantics<arbitrary>], iteration_bounds = array<i64: 2, 1>, scalar_prefetch = 0 : i64, scratch_operands = 3 : i64, tpu.core_type = #tpu.core_type<tc>, window_params = [{transform_indices = @transform_0, window_bounds = array<i64: 8, 4, 128>}, {transform_indices = @transform_1, window_bounds = array<i64: 512, 128>}, {pipeline_mode = #tpu.pipeline_mode<synchronous>, transform_indices = @transform_2, window_bounds = array<i64: 1, 512>}, {transform_indices = @transform_3, window_bounds = array<i64: 8, 512>}]} {
    %c0_i32 = arith.constant 0 : i32
    %0 = arith.cmpi eq, %arg1, %c0_i32 : i32
    %1 = arith.extui %0 : i1 to i32
    %c0_i32_0 = arith.constant 0 : i32
    %2 = arith.cmpi ne, %1, %c0_i32_0 : i32
    scf.if %2 {
      %c0_20 = arith.constant 0 : index
      %c0_21 = arith.constant 0 : index
      %c0_22 = arith.constant 0 : index
      %35 = vector.load %arg2[%c0_20, %c0_21, %c0_22] : memref<8x4x128xf32, #tpu.memory_space<vmem>>, vector<8x4x128xf32>
      %cst_23 = arith.constant dense<0.000000e+00> : vector<8x128xf32>
      %36 = vector.multi_reduction <add>, %35, %cst_23 [1] : vector<8x4x128xf32> to vector<8x128xf32>
      %c0_24 = arith.constant 0 : index
      %c0_25 = arith.constant 0 : index
      %37 = vector.load %arg6[%c0_24, %c0_25] : memref<8x128xf32, #tpu.memory_space<vmem>>, vector<8x128xf32>
      tpu.vector_store %arg6[%c0_24, %c0_25], %36 {strides = array<i32>} : memref<8x128xf32, #tpu.memory_space<vmem>>, vector<8x128xf32>,
      %cst_26 = arith.constant -1.000000e+30 : f32
      %38 = vector.broadcast %cst_26 : f32 to vector<8x1xf32>
      %c0_27 = arith.constant 0 : index
      %c0_28 = arith.constant 0 : index
      %39 = vector.load %arg7[%c0_27, %c0_28] : memref<8x1xf32, #tpu.memory_space<vmem>>, vector<8x1xf32>
      tpu.vector_store %arg7[%c0_27, %c0_28], %38 {strides = array<i32>} : memref<8x1xf32, #tpu.memory_space<vmem>>, vector<8x1xf32>,
      %cst_29 = arith.constant 0.000000e+00 : f32
      %40 = vector.broadcast %cst_29 : f32 to vector<8x1xf32>
      %c0_30 = arith.constant 0 : index
      %c0_31 = arith.constant 0 : index
      %41 = vector.load %arg8[%c0_30, %c0_31] : memref<8x1xf32, #tpu.memory_space<vmem>>, vector<8x1xf32>
      tpu.vector_store %arg8[%c0_30, %c0_31], %40 {strides = array<i32>} : memref<8x1xf32, #tpu.memory_space<vmem>>, vector<8x1xf32>,
    } else {
    }
    %c0 = arith.constant 0 : index
    %c0_1 = arith.constant 0 : index
    %3 = vector.load %arg6[%c0, %c0_1] : memref<8x128xf32, #tpu.memory_space<vmem>>, vector<8x128xf32>
    %4 = arith.truncf %3 : vector<8x128xf32> to vector<8x128xbf16>
    %c0_2 = arith.constant 0 : index
    %c0_3 = arith.constant 0 : index
    %5 = vector.load %arg3[%c0_2, %c0_3] : memref<512x128xbf16, #tpu.memory_space<vmem>>, vector<512x128xbf16>
    %cst = arith.constant dense<0.000000e+00> : vector<8x512xf32>
    %6 = tpu.matmul %4, %5, %cst {dimension_numbers = #tpu.dot_dimension_numbers<[1], [1], [0], [0], [0, 0, 1, 0], [], []>} : vector<8x128xbf16>, vector<512x128xbf16>, vector<8x512xf32> -> vector<8x512xf32>
    %c512_i32 = arith.constant 512 : i32
    %7 = arith.muli %arg1, %c512_i32 : i32
    %8 = tpu.assume_multiple %7, 128 : i32
    %c0_4 = arith.constant 0 : index
    %9 = arith.index_cast %8 : i32 to index
    %10 = vector.load %arg4[%c0_4, %9] : memref<1x512xf32, #tpu.memory_space<vmem>>, vector<1x512xf32>
    %11 = vector.broadcast %10 : vector<1x512xf32> to vector<8x512xf32>
    %12 = arith.addf %6, %11 : vector<8x512xf32>
    %c0_5 = arith.constant 0 : index
    %13 = arith.index_cast %8 : i32 to index
    %14 = vector.load %arg5[%c0_5, %13] : memref<8x512xf32, #tpu.memory_space<vmem>>, vector<8x512xf32>
    tpu.vector_store %arg5[%c0_5, %13], %12 {strides = array<i32>} : memref<8x512xf32, #tpu.memory_space<vmem>>, vector<8x512xf32>,
    %c0_6 = arith.constant 0 : index
    %c0_7 = arith.constant 0 : index
    %15 = vector.load %arg7[%c0_6, %c0_7] : memref<8x1xf32, #tpu.memory_space<vmem>>, vector<8x1xf32>
    %cst_8 = arith.constant dense<0xFF800000> : vector<8xf32>
    %16 = vector.multi_reduction <maximumf>, %12, %cst_8 [1] : vector<8x512xf32> to vector<8xf32>
    %17 = vector.shape_cast %16 : vector<8xf32> to vector<8x1xf32>
    %18 = arith.maximumf %15, %17 : vector<8x1xf32>
    %c0_9 = arith.constant 0 : index
    %c0_10 = arith.constant 0 : index
    %19 = vector.load %arg8[%c0_9, %c0_10] : memref<8x1xf32, #tpu.memory_space<vmem>>, vector<8x1xf32>
    %c0_11 = arith.constant 0 : index
    %c0_12 = arith.constant 0 : index
    %20 = vector.load %arg7[%c0_11, %c0_12] : memref<8x1xf32, #tpu.memory_space<vmem>>, vector<8x1xf32>
    %21 = arith.subf %20, %18 : vector<8x1xf32>
    %22 = math.exp %21 : vector<8x1xf32>
    %23 = arith.mulf %19, %22 : vector<8x1xf32>
    %24 = vector.broadcast %18 : vector<8x1xf32> to vector<8x512xf32>
    %25 = arith.subf %12, %24 : vector<8x512xf32>
    %26 = math.exp %25 : vector<8x512xf32>
    %cst_13 = arith.constant dense<0.000000e+00> : vector<8xf32>
    %27 = vector.multi_reduction <add>, %26, %cst_13 [1] : vector<8x512xf32> to vector<8xf32>
    %28 = vector.shape_cast %27 : vector<8xf32> to vector<8x1xf32>
    %29 = arith.addf %23, %28 : vector<8x1xf32>
    %c0_14 = arith.constant 0 : index
    %c0_15 = arith.constant 0 : index
    %30 = vector.load %arg8[%c0_14, %c0_15] : memref<8x1xf32, #tpu.memory_space<vmem>>, vector<8x1xf32>
    tpu.vector_store %arg8[%c0_14, %c0_15], %29 {strides = array<i32>} : memref<8x1xf32, #tpu.memory_space<vmem>>, vector<8x1xf32>,
    %c0_16 = arith.constant 0 : index
    %c0_17 = arith.constant 0 : index
    %31 = vector.load %arg7[%c0_16, %c0_17] : memref<8x1xf32, #tpu.memory_space<vmem>>, vector<8x1xf32>
    tpu.vector_store %arg7[%c0_16, %c0_17], %18 {strides = array<i32>} : memref<8x1xf32, #tpu.memory_space<vmem>>, vector<8x1xf32>,
    %c0_i32_18 = arith.constant 0 : i32
    %32 = arith.cmpi eq, %arg1, %c0_i32_18 : i32
    %33 = arith.extui %32 : i1 to i32
    %c0_i32_19 = arith.constant 0 : i32
    %34 = arith.cmpi ne, %33, %c0_i32_19 : i32
    scf.if %34 {
      %c0_20 = arith.constant 0 : index
      %c0_21 = arith.constant 0 : index
      %35 = vector.load %arg7[%c0_20, %c0_21] : memref<8x1xf32, #tpu.memory_space<vmem>>, vector<8x1xf32>
      %c0_22 = arith.constant 0 : index
      %c0_23 = arith.constant 0 : index
      %36 = vector.load %arg8[%c0_22, %c0_23] : memref<8x1xf32, #tpu.memory_space<vmem>>, vector<8x1xf32>
      %37 = math.log %36 : vector<8x1xf32>
      %38 = arith.addf %35, %37 : vector<8x1xf32>
      %c0_24 = arith.constant 0 : index
      %c0_25 = arith.constant 0 : index
      %39 = vector.load %arg5[%c0_24, %c0_25] : memref<8x512xf32, #tpu.memory_space<vmem>>, vector<8x512xf32>
      %40 = vector.broadcast %38 : vector<8x1xf32> to vector<8x512xf32>
      %41 = arith.subf %39, %40 : vector<8x512xf32>
      %c0_26 = arith.constant 0 : index
      %c0_27 = arith.constant 0 : index
      %42 = vector.load %arg5[%c0_26, %c0_27] : memref<8x512xf32, #tpu.memory_space<vmem>>, vector<8x512xf32>
      tpu.vector_store %arg5[%c0_26, %c0_27], %41 {strides = array<i32>} : memref<8x512xf32, #tpu.memory_space<vmem>>, vector<8x512xf32>,
    } else {
    }
    return
  }
  func.func @transform_0(%arg0: i32, %arg1: i32) -> (i32, i32, i32) {
    %c0_i32 = arith.constant 0 : i32
    %c0_i32_0 = arith.constant 0 : i32
    %c0_i32_1 = arith.constant 0 : i32
    return %arg0, %c0_i32, %c0_i32_0 : i32, i32, i32
  }
  func.func @transform_1(%arg0: i32, %arg1: i32) -> (i32, i32) {
    %c0_i32 = arith.constant 0 : i32
    %c0_i32_0 = arith.constant 0 : i32
    return %arg1, %c0_i32 : i32, i32
  }
  func.func @transform_2(%arg0: i32, %arg1: i32) -> (i32, i32) {
    %c0_i32 = arith.constant 0 : i32
    %c0_i32_0 = arith.constant 0 : i32
    %c0_i32_1 = arith.constant 0 : i32
    return %c0_i32, %c0_i32_0 : i32, i32
  }
  func.func @transform_3(%arg0: i32, %arg1: i32) -> (i32, i32) {
    %c0_i32 = arith.constant 0 : i32
    %c0_i32_0 = arith.constant 0 : i32
    return %arg0, %c0_i32 : i32, i32
  }
}

</mosaic_0001>

<llo_original>
// kernel: tpu_custom_call.1
$region0: #{tpu_custom_call.1}
  #allocation0 [shape = 'u32[]', space=smem, size = 0x4, offset = 0x4, fixed_abs, tag = 'smem constant byte address 0x4 - core index']
  #allocation1 [shape = 'u32[144,128]{1,0:T(1,128)}', space=vmem, size = 0x12000, scoped, tag = 'internal scratch']
  #allocation2 [shape = 'f32[8,128]{1,0:T(8,128)}', space=vmem, size = 0x1000, scoped, tag = 'scratch operand']
  #allocation3 [shape = 'f32[8,1]{1,0:T(8,128)}', space=vmem, size = 0x1000, scoped, tag = 'scratch operand']
  #allocation4 [shape = 'f32[8,1]{1,0:T(8,128)}', space=vmem, size = 0x1000, scoped, tag = 'scratch operand']
  %s0 = inlined_call_operand.hbm [shape: f32[16,4,128], index: 0, kind: input, shape index: {}]
  %s1 = inlined_call_operand.hbm [shape: bf16[512,128], index: 1, kind: input, shape index: {}]
  %s2 = inlined_call_operand.hbm [shape: f32[1,512], index: 2, kind: input, shape index: {}]
  %s3 = inlined_call_operand.hbm [shape: f32[16,512], index: 3, kind: output, shape index: {}]
  %s4 = sld [smem:[#allocation0]]
  $region65: #{tpu_custom_call.1} parent=0
    _
  %s6 = ssub.s32 1, %s4
  %s7 = scalar_select 0, %s6, %s4
  $region1: #{tpu_custom_call.1} parent=0
    #allocation5 [shape = 'u8[32768]{0}', space=vmem, size = 0x8000, scoped, tag = 'input window, operand 0']
    #allocation6 [shape = 's32[2]{0}', space=sflag, size = 0x8, scoped, tag = 'scoped memory for tpu_custom_call.1']
    #allocation7 [shape = 's32[2]{0}', space=sflag, size = 0x8, scoped, tag = 'scoped memory for tpu_custom_call.1']
    #allocation8 [shape = 'u8[131072]{0}', space=vmem, size = 0x20000, scoped, tag = 'input window, operand 1, single buffered']
    #allocation9 [shape = 's32[1]{0}', space=sflag, size = 0x4, scoped, tag = 'scoped memory for tpu_custom_call.1']
    #allocation10 [shape = 'u8[2048]{0}', space=vmem, size = 0x800, scoped, tag = 'input window, operand 2, single buffered']
    #allocation11 [shape = 'u8[32768]{0}', space=vmem, size = 0x8000, scoped, tag = 'output window, operand 0']
    %8 = vsyncpa [#allocation6], 0
    %s9 = scalar_lea.sflag [#allocation6], 1
    %10 = vsyncpa %s9, 0
    %11 = vsyncpa [#allocation9], 0
    %12 = vsyncpa [#allocation7], 0
    %s13 = scalar_lea.sflag [#allocation7], 1
    %14 = vsyncpa %s13, 0
    loop: start=0, step=1, limit=4
    $region2: #{tpu_custom_call.1} parent=1 // loop_pre_header
      _
    $region3: #{tpu_custom_call.1} parent=1 // loop_header
      %s16 = sphi 0, %s20
      %p17 = scmp.ge.s32.totalorder %s16, 4
      %s23 = sphi 0, %s35
      %s24 = sphi 0, %s31
      %s25 = sphi 0, %s23
      %s26 = sphi 0, %s24
      %s27 = sphi 0, %s25
      %s28 = sphi 0, %s26
      %s38 = sphi 0, %s40
      %s41 = sphi 0, %s38
      %s42 = sphi 0, %s41
      %s58 = sphi 0, %s42
      %s64 = sphi 0, %s66
      %s67 = sphi 0, %s64
      %s68 = sphi 0, %s67
      %s84 = sphi 0, %s68
      %s88 = sphi 0, %s88
      %s90 = sphi 0, %s88
      %s91 = sphi 0, %s90
      %s105 = sphi 0, %s91
      %s111 = sphi 0, %s113
      %s114 = sphi 0, %s111
      %s115 = sphi 0, %s114
      %s131 = sphi 0, %s115
    $region4: #{tpu_custom_call.1} parent=1 // loop_header_branch
      %19 = sbr.rel (%p17) target = $region8
    $region5: #{tpu_custom_call.1} parent=1 // loop_body
      %s21 = ssub.s32 %s16, 1
      %s22 = ssub.s32 %s16, 2
      %s29 = sadd.s32 1, %s24
      %p30 = scmp.ge.s32.totalorder %s29, 1
      %s31 = scalar_select %p30, 0, %s29
      %s32 = sadd.s32 1, %s23
      %s33 = scalar_select %p30, %s32, %s23
      %p34 = scmp.ge.s32.totalorder %s33, 2
      %s35 = scalar_select %p34, 0, %s33
      %s36 = ssub.s32 %s23, %s35
      %p37 = scmp.eq.s32.totalorder %s36, 0
      %s39 = sadd.s32 %s38, 1
      %s40 = scalar_select %p37, %s38, %s39
      %p43 = pneg %p37
      %p44 = scmp.eq.s32.totalorder %s16, 1
      %p45 = por %p43, %p44
      %p46 = scmp.ne.s32.totalorder %s38, %s41
      %p47 = scmp.eq.s32.totalorder %s16, 0
      %p48 = por %p46, %p47
      %p49 = scmp.ne.s32.totalorder %s38, %s41
      %p50 = scmp.eq.s32.totalorder %s21, 1
      %p51 = por %p49, %p50
      %p52 = scmp.ne.s32.totalorder %s41, %s42
      %p53 = scmp.eq.s32.totalorder %s21, 0
      %p54 = por %p52, %p53
      %p55 = scmp.ne.s32.totalorder %s41, %s42
      %p56 = scmp.eq.s32.totalorder %s22, 1
      %p57 = por %p55, %p56
      %p59 = scmp.ne.s32.totalorder %s42, %s58
      %p60 = scmp.eq.s32.totalorder %s22, 0
      %p61 = por %p59, %p60
      %s62 = ssub.s32 %s24, %s31
      %p63 = scmp.eq.s32.totalorder %s62, 0
      %s65 = sadd.s32 %s64, 1
      %s66 = scalar_select %p63, %s64, %s65
      %p69 = pneg %p63
      %p70 = scmp.eq.s32.totalorder %s16, 1
      %p71 = por %p69, %p70
      %p72 = scmp.ne.s32.totalorder %s64, %s67
      %p73 = scmp.eq.s32.totalorder %s16, 0
      %p74 = por %p72, %p73
      %p75 = scmp.ne.s32.totalorder %s64, %s67
      %p76 = scmp.eq.s32.totalorder %s21, 1
      %p77 = por %p75, %p76
      %p78 = scmp.ne.s32.totalorder %s67, %s68
      %p79 = scmp.eq.s32.totalorder %s21, 0
      %p80 = por %p78, %p79
      %p81 = scmp.ne.s32.totalorder %s67, %s68
      %p82 = scmp.eq.s32.totalorder %s22, 1
      %p83 = por %p81, %p82
      %p85 = scmp.ne.s32.totalorder %s68, %s84
      %p86 = scmp.eq.s32.totalorder %s22, 0
      %p87 = por %p85, %p86
      %s89 = sadd.s32 %s88, 1
      %p92 = scmp.eq.s32.totalorder %s16, 1
      %p93 = scmp.ne.s32.totalorder %s88, %s90
      %p94 = scmp.eq.s32.totalorder %s16, 0
      %p95 = por %p93, %p94
      %p96 = scmp.ne.s32.totalorder %s88, %s90
      %p97 = scmp.eq.s32.totalorder %s21, 1
      %p98 = por %p96, %p97
      %p99 = scmp.ne.s32.totalorder %s90, %s91
      %p100 = scmp.eq.s32.totalorder %s21, 0
      %p101 = por %p99, %p100
      %p102 = scmp.ne.s32.totalorder %s90, %s91
      %p103 = scmp.eq.s32.totalorder %s22, 1
      %p104 = por %p102, %p103
      %p106 = scmp.ne.s32.totalorder %s91, %s105
      %p107 = scmp.eq.s32.totalorder %s22, 0
      %p108 = por %p106, %p107
      %s109 = ssub.s32 %s23, %s35
      %p110 = scmp.eq.s32.totalorder %s109, 0
      %s112 = sadd.s32 %s111, 1
      %s113 = scalar_select %p110, %s111, %s112
      %p116 = pneg %p110
      %p117 = scmp.eq.s32.totalorder %s16, 1
      %p118 = por %p116, %p117
      %p119 = scmp.ne.s32.totalorder %s111, %s114
      %p120 = scmp.eq.s32.totalorder %s16, 0
      %p121 = por %p119, %p120
      %p122 = scmp.ne.s32.totalorder %s111, %s114
      %p123 = scmp.eq.s32.totalorder %s21, 1
      %p124 = por %p122, %p123
      %p125 = scmp.ne.s32.totalorder %s114, %s115
      %p126 = scmp.eq.s32.totalorder %s21, 0
      %p127 = por %p125, %p126
      %p128 = scmp.ne.s32.totalorder %s114, %s115
      %p129 = scmp.eq.s32.totalorder %s22, 1
      %p130 = por %p128, %p129
      %p132 = scmp.ne.s32.totalorder %s115, %s131
      %p133 = scmp.eq.s32.totalorder %s22, 0
      %p134 = por %p132, %p133
      %p135 = scmp.le.s32.totalorder 1, %s16
      %p136 = scmp.lt.s32.totalorder %s16, 3
      %p137 = pnand %p135, %p136
      %p138 = pneg %p137
      // Predicated region
      $region9: #{tpu_custom_call.1} parent=5 // pred_check
        _
      $region10: #{tpu_custom_call.1} parent=5 // pred_check_branch
        %140 = sbr.rel (%p137) target = $region12
      $region11: #{tpu_custom_call.1} parent=5 // pred_region
        %s141 = ssub.s32 %s16, 1
        // Predicated region
        $region13: #{tpu_custom_call.1} parent=11 // pred_check
          %p142 = pneg %p80
        $region14: #{tpu_custom_call.1} parent=11 // pred_check_branch
          %144 = sbr.rel (%p142) target = $region16
        $region15: #{tpu_custom_call.1} parent=11 // pred_region
          %s145 = smul.u32 64, %s26
          %s147 = ssub.s32 4096, 4096
          %148 = vsyncadd [#allocation9], %s147
          %s149 = smul.addr %s145, 64
          %s150 = scalar_lea.hbm %s1, %s149
          %s151 = sshll.u32 [#allocation8], 4
          %s152 = int_to_ptr.vmem [resolvable:$true] %s151
          %157 = dma.hbm_to_vmem [thread:$0]  %s150, 4096, %s152, [#allocation9], 64, 64, 4
        $region16: #{tpu_custom_call.1} parent=11 // pred_fallthru
          _
        // Predicated region
        $region17: #{tpu_custom_call.1} parent=11 // pred_check
          %p158 = pneg %p101
        $region18: #{tpu_custom_call.1} parent=11 // pred_check_branch
          %160 = sbr.rel (%p158) target = $region20
        $region19: #{tpu_custom_call.1} parent=11 // pred_region
          %s162 = ssub.s32 64, 64
          %163 = vsyncadd [#allocation9], %s162
          %s165 = sshll.u32 [#allocation10], 4
          %s166 = int_to_ptr.vmem [resolvable:$true] %s165
          %168 = dma.hbm_to_vmem [thread:$0]  %s2, 64, %s166, [#allocation9]
        $region20: #{tpu_custom_call.1} parent=11 // pred_fallthru
          _
      $region12: #{tpu_custom_call.1} parent=5 // pred_fallthru
        _
      %p169 = scmp.lt.s32.totalorder %s16, 2
      // Predicated region
      $region21: #{tpu_custom_call.1} parent=5 // pred_check
        %p170 = pneg %p169
      $region22: #{tpu_custom_call.1} parent=5 // pred_check_branch
        %172 = sbr.rel (%p170) target = $region24
      $region23: #{tpu_custom_call.1} parent=5 // pred_region
        // Predicated region
        $region25: #{tpu_custom_call.1} parent=23 // pred_check
          %p173 = pneg %p48
        $region26: #{tpu_custom_call.1} parent=23 // pred_check_branch
          %175 = sbr.rel (%p173) target = $region28
        $region27: #{tpu_custom_call.1} parent=23 // pred_region
          %s176 = sand.u32 %s38, 1
          %s177 = scalar_lea.sflag [#allocation6], %s176
          %s178 = sand.u32 %s38, 1
          %s179 = smul.addr %s178, 32
          %s180 = scalar_lea.vmem [#allocation5], %s179
          %s181 = smul.u32 8, %s23
          %s183 = ssub.s32 512, 512
          %184 = vsyncadd %s177, %s183
          %s185 = smul.addr %s181, 64
          %s186 = scalar_lea.hbm %s0, %s185
          %s187 = sshll.u32 %s180, 4
          %s188 = int_to_ptr.vmem [resolvable:$true] %s187
          %193 = dma.hbm_to_vmem [thread:$0]  %s186, 512, %s188, %s177, 64, 64, 4
        $region28: #{tpu_custom_call.1} parent=23 // pred_fallthru
          _
      $region24: #{tpu_custom_call.1} parent=5 // pred_fallthru
        _
      %p194 = scmp.le.s32.totalorder 1, %s16
      %p195 = scmp.lt.s32.totalorder %s16, 3
      %p196 = pnand %p194, %p195
      %p197 = pneg %p196
      // Predicated region
      $region29: #{tpu_custom_call.1} parent=5 // pred_check
        _
      $region30: #{tpu_custom_call.1} parent=5 // pred_check_branch
        %199 = sbr.rel (%p196) target = $region32
      $region31: #{tpu_custom_call.1} parent=5 // pred_region
        %s200 = ssub.s32 %s16, 1
        %s201 = sand.u32 %s41, 1
        %s202 = scalar_lea.sflag [#allocation6], %s201
        %s203 = sand.u32 %s41, 1
        %s204 = smul.addr %s203, 32
        %s205 = scalar_lea.vmem [#allocation5], %s204
        // Predicated region
        $region33: #{tpu_custom_call.1} parent=31 // pred_check
          %p206 = pneg %p54
        $region34: #{tpu_custom_call.1} parent=31 // pred_check_branch
          %208 = sbr.rel (%p206) target = $region36
        $region35: #{tpu_custom_call.1} parent=31 // pred_region
          %209 = dma.done %s202, 512
        $region36: #{tpu_custom_call.1} parent=31 // pred_fallthru
          _
        // Predicated region
        $region37: #{tpu_custom_call.1} parent=31 // pred_check
          %p210 = pneg %p80
        $region38: #{tpu_custom_call.1} parent=31 // pred_check_branch
          %212 = sbr.rel (%p210) target = $region40
        $region39: #{tpu_custom_call.1} parent=31 // pred_region
          %213 = dma.done [#allocation9], 4096
        $region40: #{tpu_custom_call.1} parent=31 // pred_fallthru
          _
        // Predicated region
        $region41: #{tpu_custom_call.1} parent=31 // pred_check
          %p214 = pneg %p101
        $region42: #{tpu_custom_call.1} parent=31 // pred_check_branch
          %216 = sbr.rel (%p214) target = $region44
        $region43: #{tpu_custom_call.1} parent=31 // pred_region
          %217 = dma.done [#allocation9], 64
        $region44: #{tpu_custom_call.1} parent=31 // pred_fallthru
          _
        %s218 = sand.u32 %s41, 1
        %s219 = scalar_lea.sflag [#allocation6], %s218
        %s220 = sand.u32 %s41, 1
        %s221 = smul.addr %s220, 32
        %s222 = scalar_lea.vmem [#allocation5], %s221
        %p223 = pneg %p54
        %p224 = pneg %p51
        %p225 = pneg %p80
        %p226 = pneg %p77
        %p227 = pneg %p101
        %p228 = pneg %p98
        %p229 = pneg %p127
        %p230 = pneg %p124
        %s231 = sand.u32 %s114, 1
        %s232 = scalar_lea.sflag [#allocation7], %s231
        %s233 = sand.u32 %s114, 1
        %s234 = smul.addr %s233, 32
        %s235 = scalar_lea.vmem [#allocation11], %s234
        %s236 = smul.u32 8, %s25
        %s237 = smul.u32 64, %s26
        %p239 = scmp.eq.s32.totalorder %s26, 0
        // Predicated region
        $region45: #{tpu_custom_call.1} parent=31 // pred_check
          %p240 = pneg %p239
        $region46: #{tpu_custom_call.1} parent=31 // pred_check_branch
          %242 = sbr.rel (%p240) target = $region48
        $region47: #{tpu_custom_call.1} parent=31 // pred_region
          %v243 = vld [vmem:[%s205] sm:$0xf]
          %v244 = vld [vmem:[%s205 + $0x4] sm:$0xf]
          %v245 = vld [vmem:[%s205 + $0x8] sm:$0xf]
          %v246 = vld [vmem:[%s205 + $0xc] sm:$0xf]
          %v247 = vld [vmem:[%s205 + $0x10] sm:$0xf]
          %v248 = vld [vmem:[%s205 + $0x14] sm:$0xf]
          %v249 = vld [vmem:[%s205 + $0x18] sm:$0xf]
          %v250 = vld [vmem:[%s205 + $0x1c] sm:$0xf]
          %vm251 = vcmask 1043456
          %v252 = vsel %vm251, %v243, 0.0
          %v253 = vrot.slane %v252, 4
          %v254 = vadd.f32 %v252, %v253
          %v255 = vrot.slane %v254, 2
          %v256 = vadd.f32 %v254, %v255
          %v257 = vrot.slane %v256, 1
          %v258 = vadd.f32 %v256, %v257
          %v259 = vsel %vm251, %v244, 0.0
          %v260 = vrot.slane %v259, 4
          %v261 = vadd.f32 %v259, %v260
          %v262 = vrot.slane %v261, 2
          %v263 = vadd.f32 %v261, %v262
          %v264 = vrot.slane %v263, 1
          %v265 = vadd.f32 %v263, %v264
          %v266 = vsel %vm251, %v245, 0.0
          %v267 = vrot.slane %v266, 4
          %v268 = vadd.f32 %v266, %v267
          %v269 = vrot.slane %v268, 2
          %v270 = vadd.f32 %v268, %v269
          %v271 = vrot.slane %v270, 1
          %v272 = vadd.f32 %v270, %v271
          %v273 = vsel %vm251, %v246, 0.0
          %v274 = vrot.slane %v273, 4
          %v275 = vadd.f32 %v273, %v274
          %v276 = vrot.slane %v275, 2
          %v277 = vadd.f32 %v275, %v276
          %v278 = vrot.slane %v277, 1
          %v279 = vadd.f32 %v277, %v278
          %v280 = vsel %vm251, %v247, 0.0
          %v281 = vrot.slane %v280, 4
          %v282 = vadd.f32 %v280, %v281
          %v283 = vrot.slane %v282, 2
          %v284 = vadd.f32 %v282, %v283
          %v285 = vrot.slane %v284, 1
          %v286 = vadd.f32 %v284, %v285
          %v287 = vsel %vm251, %v248, 0.0
          %v288 = vrot.slane %v287, 4
          %v289 = vadd.f32 %v287, %v288
          %v290 = vrot.slane %v289, 2
          %v291 = vadd.f32 %v289, %v290
          %v292 = vrot.slane %v291, 1
          %v293 = vadd.f32 %v291, %v292
          %v294 = vsel %vm251, %v249, 0.0
          %v295 = vrot.slane %v294, 4
          %v296 = vadd.f32 %v294, %v295
          %v297 = vrot.slane %v296, 2
          %v298 = vadd.f32 %v296, %v297
          %v299 = vrot.slane %v298, 1
          %v300 = vadd.f32 %v298, %v299
          %v301 = vsel %vm251, %v250, 0.0
          %v302 = vrot.slane %v301, 4
          %v303 = vadd.f32 %v301, %v302
          %v304 = vrot.slane %v303, 2
          %v305 = vadd.f32 %v303, %v304
          %v306 = vrot.slane %v305, 1
          %v307 = vadd.f32 %v305, %v306
          %vm316 = vcmask 1041409
          %v317 = vsel %vm316, %v265, %v258
          %vm318 = vcmask 1042434
          %v319 = vsel %vm318, %v272, %v317
          %vm320 = vcmask 1043459
          %v321 = vsel %vm320, %v279, %v319
          %vm322 = vcmask 1044484
          %v323 = vsel %vm322, %v286, %v321
          %vm324 = vcmask 1045509
          %v325 = vsel %vm324, %v293, %v323
          %vm326 = vcmask 1046534
          %v327 = vsel %vm326, %v300, %v325
          %vm328 = vcmask 1047559
          %v329 = vsel %vm328, %v307, %v327
          %331 = vst [vmem:[#allocation2] sm:$0xff] %v329
          %vm332 = vcmask 7168
          %333 = vst.msk [vmem:[#allocation3] sm:$0xff] %vm332, -1e+30
          %334 = vst.msk [vmem:[#allocation4] sm:$0xff] %vm332, 0.0
        $region48: #{tpu_custom_call.1} parent=31 // pred_fallthru
          _
        %v335 = vld [vmem:[#allocation2] sm:$0xff]
        %v336 = vpack.c.bf16 %v335, %v335
        %v337 = vld [vmem:[#allocation8] sm:$0xf]
        %v338 = vld [vmem:[#allocation8 + $0x4] sm:$0xf]
        %v339 = vld [vmem:[#allocation8 + $0x8] sm:$0xf]
        %v340 = vld [vmem:[#allocation8 + $0xc] sm:$0xf]
        %v341 = vld [vmem:[#allocation8 + $0x10] sm:$0xf]
        %v342 = vld [vmem:[#allocation8 + $0x14] sm:$0xf]
        %v343 = vld [vmem:[#allocation8 + $0x18] sm:$0xf]
        %v344 = vld [vmem:[#allocation8 + $0x1c] sm:$0xf]
        %v345 = vld [vmem:[#allocation8 + $0x20] sm:$0xf]
        %v346 = vld [vmem:[#allocation8 + $0x24] sm:$0xf]
        %v347 = vld [vmem:[#allocation8 + $0x28] sm:$0xf]
        %v348 = vld [vmem:[#allocation8 + $0x2c] sm:$0xf]
        %v349 = vld [vmem:[#allocation8 + $0x30] sm:$0xf]
        %v350 = vld [vmem:[#allocation8 + $0x34] sm:$0xf]
        %v351 = vld [vmem:[#allocation8 + $0x38] sm:$0xf]
        %v352 = vld [vmem:[#allocation8 + $0x3c] sm:$0xf]
        %v353 = vld [vmem:[#allocation8 + $0x40] sm:$0xf]
        %v354 = vld [vmem:[#allocation8 + $0x44] sm:$0xf]
        %v355 = vld [vmem:[#allocation8 + $0x48] sm:$0xf]
        %v356 = vld [vmem:[#allocation8 + $0x4c] sm:$0xf]
        %v357 = vld [vmem:[#allocation8 + $0x50] sm:$0xf]
        %v358 = vld [vmem:[#allocation8 + $0x54] sm:$0xf]
        %v359 = vld [vmem:[#allocation8 + $0x58] sm:$0xf]
        %v360 = vld [vmem:[#allocation8 + $0x5c] sm:$0xf]
        %v361 = vld [vmem:[#allocation8 + $0x60] sm:$0xf]
        %v362 = vld [vmem:[#allocation8 + $0x64] sm:$0xf]
        %v363 = vld [vmem:[#allocation8 + $0x68] sm:$0xf]
        %v364 = vld [vmem:[#allocation8 + $0x6c] sm:$0xf]
        %v365 = vld [vmem:[#allocation8 + $0x70] sm:$0xf]
        %v366 = vld [vmem:[#allocation8 + $0x74] sm:$0xf]
        %v367 = vld [vmem:[#allocation8 + $0x78] sm:$0xf]
        %v368 = vld [vmem:[#allocation8 + $0x7c] sm:$0xf]
        %v369 = vld [vmem:[#allocation8 + $0x80] sm:$0xf]
        %v370 = vld [vmem:[#allocation8 + $0x84] sm:$0xf]
        %v371 = vld [vmem:[#allocation8 + $0x88] sm:$0xf]
        %v372 = vld [vmem:[#allocation8 + $0x8c] sm:$0xf]
        %v373 = vld [vmem:[#allocation8 + $0x90] sm:$0xf]
        %v374 = vld [vmem:[#allocation8 + $0x94] sm:$0xf]
        %v375 = vld [vmem:[#allocation8 + $0x98] sm:$0xf]
        %v376 = vld [vmem:[#allocation8 + $0x9c] sm:$0xf]
        %v377 = vld [vmem:[#allocation8 + $0xa0] sm:$0xf]
        %v378 = vld [vmem:[#allocation8 + $0xa4] sm:$0xf]
        %v379 = vld [vmem:[#allocation8 + $0xa8] sm:$0xf]
        %v380 = vld [vmem:[#allocation8 + $0xac] sm:$0xf]
        %v381 = vld [vmem:[#allocation8 + $0xb0] sm:$0xf]
        %v382 = vld [vmem:[#allocation8 + $0xb4] sm:$0xf]
        %v383 = vld [vmem:[#allocation8 + $0xb8] sm:$0xf]
        %v384 = vld [vmem:[#allocation8 + $0xbc] sm:$0xf]
        %v385 = vld [vmem:[#allocation8 + $0xc0] sm:$0xf]
        %v386 = vld [vmem:[#allocation8 + $0xc4] sm:$0xf]
        %v387 = vld [vmem:[#allocation8 + $0xc8] sm:$0xf]
        %v388 = vld [vmem:[#allocation8 + $0xcc] sm:$0xf]
        %v389 = vld [vmem:[#allocation8 + $0xd0] sm:$0xf]
        %v390 = vld [vmem:[#allocation8 + $0xd4] sm:$0xf]
        %v391 = vld [vmem:[#allocation8 + $0xd8] sm:$0xf]
        %v392 = vld [vmem:[#allocation8 + $0xdc] sm:$0xf]
        %v393 = vld [vmem:[#allocation8 + $0xe0] sm:$0xf]
        %v394 = vld [vmem:[#allocation8 + $0xe4] sm:$0xf]
        %v395 = vld [vmem:[#allocation8 + $0xe8] sm:$0xf]
        %v396 = vld [vmem:[#allocation8 + $0xec] sm:$0xf]
        %v397 = vld [vmem:[#allocation8 + $0xf0] sm:$0xf]
        %v398 = vld [vmem:[#allocation8 + $0xf4] sm:$0xf]
        %v399 = vld [vmem:[#allocation8 + $0xf8] sm:$0xf]
        %v400 = vld [vmem:[#allocation8 + $0xfc] sm:$0xf]
        %s401 = smul.u32 %s26, 512
        %s402 = sshra.s32 %s401, 7
        %s403 = sand.u32 %s401, 127
        %s404 = scalar_lea.vmem [#allocation10], %s402
        %v405 = vld [vmem:[%s404] sm:$0xf]
        %v407 = vlaneseq
        %v408 = vshrl.u32 %v407, 7
        %v409 = vsub.s32 0, %v408
        %v410 = vrot.slane %v405, %v409
        %v411 = vlaneseq
        %v412 = vshrl.u32 %v411, 7
        %v413 = vsub.s32 1, %v412
        %v414 = vrot.slane %v405, %v413
        %v415 = vlaneseq
        %v416 = vshrl.u32 %v415, 7
        %v417 = vsub.s32 2, %v416
        %v418 = vrot.slane %v405, %v417
        %v419 = vlaneseq
        %v420 = vshrl.u32 %v419, 7
        %v421 = vsub.s32 3, %v420
        %v422 = vrot.slane %v405, %v421
        %v491 = vunpack.c.l.b16 %v337
        %v492 = vunpack.c.l.b16 %v338
        %v493 = vunpack.c.l.b16 %v339
        %v494 = vunpack.c.l.b16 %v340
        %v495 = vunpack.c.l.b16 %v341
        %v496 = vunpack.c.l.b16 %v342
        %v497 = vunpack.c.l.b16 %v343
        %v498 = vunpack.c.l.b16 %v344
        %v499 = vunpack.c.l.b16 %v345
        %v500 = vunpack.c.l.b16 %v346
        %v501 = vunpack.c.l.b16 %v347
        %v502 = vunpack.c.l.b16 %v348
        %v503 = vunpack.c.l.b16 %v349
        %v504 = vunpack.c.l.b16 %v350
        %v505 = vunpack.c.l.b16 %v351
        %v506 = vunpack.c.l.b16 %v352
        %v507 = vunpack.c.l.b16 %v353
        %v508 = vunpack.c.l.b16 %v354
        %v509 = vunpack.c.l.b16 %v355
        %v510 = vunpack.c.l.b16 %v356
        %v511 = vunpack.c.l.b16 %v357
        %v512 = vunpack.c.l.b16 %v358
        %v513 = vunpack.c.l.b16 %v359
        %v514 = vunpack.c.l.b16 %v360
        %v515 = vunpack.c.l.b16 %v361
        %v516 = vunpack.c.l.b16 %v362
        %v517 = vunpack.c.l.b16 %v363
        %v518 = vunpack.c.l.b16 %v364
        %v519 = vunpack.c.l.b16 %v365
        %v520 = vunpack.c.l.b16 %v366
        %v521 = vunpack.c.l.b16 %v367
        %v522 = vunpack.c.l.b16 %v368
        %v523 = vunpack.c.l.b16 %v369
        %v524 = vunpack.c.l.b16 %v370
        %v525 = vunpack.c.l.b16 %v371
        %v526 = vunpack.c.l.b16 %v372
        %v527 = vunpack.c.l.b16 %v373
        %v528 = vunpack.c.l.b16 %v374
        %v529 = vunpack.c.l.b16 %v375
        %v530 = vunpack.c.l.b16 %v376
        %v531 = vunpack.c.l.b16 %v377
        %v532 = vunpack.c.l.b16 %v378
        %v533 = vunpack.c.l.b16 %v379
        %v534 = vunpack.c.l.b16 %v380
        %v535 = vunpack.c.l.b16 %v381
        %v536 = vunpack.c.l.b16 %v382
        %v537 = vunpack.c.l.b16 %v383
        %v538 = vunpack.c.l.b16 %v384
        %v539 = vunpack.c.l.b16 %v385
        %v540 = vunpack.c.l.b16 %v386
        %v541 = vunpack.c.l.b16 %v387
        %v542 = vunpack.c.l.b16 %v388
        %v543 = vunpack.c.l.b16 %v389
        %v544 = vunpack.c.l.b16 %v390
        %v545 = vunpack.c.l.b16 %v391
        %v546 = vunpack.c.l.b16 %v392
        %v547 = vunpack.c.l.b16 %v393
        %v548 = vunpack.c.l.b16 %v394
        %v549 = vunpack.c.l.b16 %v395
        %v550 = vunpack.c.l.b16 %v396
        %v551 = vunpack.c.l.b16 %v397
        %v552 = vunpack.c.l.b16 %v398
        %v553 = vunpack.c.l.b16 %v399
        %v554 = vunpack.c.l.b16 %v400
        %v555 = vpack.c.b16 %v492, %v491
        %v556 = vpack.c.b16 %v494, %v493
        %v557 = vpack.c.b16 %v496, %v495
        %v558 = vpack.c.b16 %v498, %v497
        %v559 = vpack.c.b16 %v500, %v499
        %v560 = vpack.c.b16 %v502, %v501
        %v561 = vpack.c.b16 %v504, %v503
        %v562 = vpack.c.b16 %v506, %v505
        %v563 = vpack.c.b16 %v508, %v507
        %v564 = vpack.c.b16 %v510, %v509
        %v565 = vpack.c.b16 %v512, %v511
        %v566 = vpack.c.b16 %v514, %v513
        %v567 = vpack.c.b16 %v516, %v515
        %v568 = vpack.c.b16 %v518, %v517
        %v569 = vpack.c.b16 %v520, %v519
        %v570 = vpack.c.b16 %v522, %v521
        %v571 = vpack.c.b16 %v524, %v523
        %v572 = vpack.c.b16 %v526, %v525
        %v573 = vpack.c.b16 %v528, %v527
        %v574 = vpack.c.b16 %v530, %v529
        %v575 = vpack.c.b16 %v532, %v531
        %v576 = vpack.c.b16 %v534, %v533
        %v577 = vpack.c.b16 %v536, %v535
        %v578 = vpack.c.b16 %v538, %v537
        %v579 = vpack.c.b16 %v540, %v539
        %v580 = vpack.c.b16 %v542, %v541
        %v581 = vpack.c.b16 %v544, %v543
        %v582 = vpack.c.b16 %v546, %v545
        %v583 = vpack.c.b16 %v548, %v547
        %v584 = vpack.c.b16 %v550, %v549
        %v585 = vpack.c.b16 %v552, %v551
        %v586 = vpack.c.b16 %v554, %v553
        %619 = vmatprep.subr.bf16.mxu0 0
        %620 = vmatpush1.bf16.xpose.msra.mxu0 %v562
        %621 = vmatprep.subr.bf16.mxu0 0
        %622 = vmatpush1.bf16.xpose.msra.mxu0 %v561
        %623 = vmatprep.subr.bf16.mxu0 0
        %624 = vmatpush1.bf16.xpose.msra.mxu0 %v560
        %625 = vmatprep.subr.bf16.mxu0 0
        %626 = vmatpush1.bf16.xpose.msra.mxu0 %v559
        %627 = vmatprep.subr.bf16.mxu0 0
        %628 = vmatpush1.bf16.xpose.msra.mxu0 %v558
        %629 = vmatprep.subr.bf16.mxu0 0
        %630 = vmatpush1.bf16.xpose.msra.mxu0 %v557
        %631 = vmatprep.subr.bf16.mxu0 0
        %632 = vmatpush1.bf16.xpose.msra.mxu0 %v556
        %633 = vmatprep.subr.bf16.mxu0 0
        %634 = vmatpush1.bf16.xpose.msra.mxu0 %v555
        %635 = vmatprep.subr.bf16.mxu0 0
        %636 = vmatpush2.bf16.xpose.msra.mxu0 %v570
        %637 = vmatprep.subr.bf16.mxu0 0
        %638 = vmatpush2.bf16.xpose.msra.mxu0 %v569
        %639 = vmatprep.subr.bf16.mxu0 0
        %640 = vmatpush2.bf16.xpose.msra.mxu0 %v568
        %641 = vmatprep.subr.bf16.mxu0 0
        %642 = vmatpush2.bf16.xpose.msra.mxu0 %v567
        %643 = vmatprep.subr.bf16.mxu0 0
        %644 = vmatpush2.bf16.xpose.msra.mxu0 %v566
        %645 = vmatprep.subr.bf16.mxu0 0
        %646 = vmatpush2.bf16.xpose.msra.mxu0 %v565
        %647 = vmatprep.subr.bf16.mxu0 0
        %648 = vmatpush2.bf16.xpose.msra.mxu0 %v564
        %649 = vmatprep.subr.bf16.mxu0 0
        %650 = vmatpush2.bf16.xpose.msra.mxu0 %v563
        %651 = vmatprep.mubr.bf16.mxu0 0
        %652 = vmatmul.mubr.bf16.gmra.mxu0 %v336
        %v653 = vpop.f32.mrf.mxu0
        %v654 = vadd.f32 %v410, %v653
        %v655 = vpop.f32.mrf.mxu0
        %v656 = vadd.f32 %v414, %v655
        %v657 = vpop.f32.mrf.mxu0
        %v658 = vpop.f32.mrf.mxu0
        %659 = vdwg.mxu0
        %660 = vmatprep.subr.bf16.mxu0 0
        %661 = vmatpush1.bf16.xpose.msra.mxu0 %v578
        %662 = vmatprep.subr.bf16.mxu0 0
        %663 = vmatpush1.bf16.xpose.msra.mxu0 %v577
        %664 = vmatprep.subr.bf16.mxu0 0
        %665 = vmatpush1.bf16.xpose.msra.mxu0 %v576
        %666 = vmatprep.subr.bf16.mxu0 0
        %667 = vmatpush1.bf16.xpose.msra.mxu0 %v575
        %668 = vmatprep.subr.bf16.mxu0 0
        %669 = vmatpush1.bf16.xpose.msra.mxu0 %v574
        %670 = vmatprep.subr.bf16.mxu0 0
        %671 = vmatpush1.bf16.xpose.msra.mxu0 %v573
        %672 = vmatprep.subr.bf16.mxu0 0
        %673 = vmatpush1.bf16.xpose.msra.mxu0 %v572
        %674 = vmatprep.subr.bf16.mxu0 0
        %675 = vmatpush1.bf16.xpose.msra.mxu0 %v571
        %676 = vmatprep.subr.bf16.mxu0 0
        %677 = vmatpush2.bf16.xpose.msra.mxu0 %v586
        %678 = vmatprep.subr.bf16.mxu0 0
        %679 = vmatpush2.bf16.xpose.msra.mxu0 %v585
        %680 = vmatprep.subr.bf16.mxu0 0
        %681 = vmatpush2.bf16.xpose.msra.mxu0 %v584
        %682 = vmatprep.subr.bf16.mxu0 0
        %683 = vmatpush2.bf16.xpose.msra.mxu0 %v583
        %684 = vmatprep.subr.bf16.mxu0 0
        %685 = vmatpush2.bf16.xpose.msra.mxu0 %v582
        %686 = vmatprep.subr.bf16.mxu0 0
        %687 = vmatpush2.bf16.xpose.msra.mxu0 %v581
        %688 = vmatprep.subr.bf16.mxu0 0
        %689 = vmatpush2.bf16.xpose.msra.mxu0 %v580
        %690 = vmatprep.subr.bf16.mxu0 0
        %691 = vmatpush2.bf16.xpose.msra.mxu0 %v579
        %692 = vmatprep.mubr.bf16.mxu0 0
        %693 = vmatmul.mubr.bf16.gmra.mxu0 %v336
        %v694 = vpop.f32.mrf.mxu0
        %v695 = vadd.f32 %v418, %v694
        %v696 = vpop.f32.mrf.mxu0
        %v697 = vadd.f32 %v422, %v696
        %v698 = vpop.f32.mrf.mxu0
        %v699 = vpop.f32.mrf.mxu0
        %700 = vdwg.mxu0
        %s701 = smul.addr %s402, 8
        %s702 = scalar_lea.vmem %s235, %s701 [#allocation11]
        %703 = vst [vmem:[%s702] sm:$0xff] %v654
        %704 = vst [vmem:[%s702 + $0x8] sm:$0xff] %v656
        %705 = vst [vmem:[%s702 + $0x10] sm:$0xff] %v695
        %706 = vst [vmem:[%s702 + $0x18] sm:$0xff] %v697
        %v707 = vld [vmem:[#allocation3] sm:$0xff]
        %v708 = vmax.f32 %v654, %v656
        %v709 = vmax.f32 %v695, %v697
        %v710 = vmax.f32 %v708, %v709
        %711 = vmax.xlane.f32.xlu0 %v710
        %v712 = vpop.xlane.xlu0 %711
        %v713 = vmax.f32 %v707, %v712
        %v714 = vld [vmem:[#allocation4] sm:$0xff]
        %v715 = vsub.f32 %v707, %v713
        %v716 = vmul.f32 %v715, 1.442695
        %v717 = vpow.pop %v716
        %v718 = vmul.f32 %v714, %v717
        %720 = vset.pattern.permute.xlu0 0
        %721 = vperm.xlu0 %720, %v713
        %v722 = vpop.permute.xlu0 %721
        %v724 = vsub.f32 %v654, %v722
        %v725 = vsub.f32 %v656, %v722
        %v726 = vsub.f32 %v695, %v722
        %v727 = vsub.f32 %v697, %v722
        %v728 = vmul.f32 %v724, 1.442695
        %v729 = vpow.pop %v728
        %v730 = vmul.f32 %v725, 1.442695
        %v731 = vpow.pop %v730
        %v732 = vmul.f32 %v726, 1.442695
        %v733 = vpow.pop %v732
        %v734 = vmul.f32 %v727, 1.442695
        %v735 = vpow.pop %v734
        %v736 = vadd.f32 %v729, %v731
        %v737 = vadd.f32 %v736, %v733
        %v738 = vadd.f32 %v737, %v735
        %739 = vadd.xlane.f32.xlu0 %v738
        %v740 = vpop.xlane.xlu0 %739
        %v741 = vadd.f32 %v718, %v740
        %vm742 = vcmask 7168
        %743 = vst.msk [vmem:[#allocation4] sm:$0xff] %vm742, %v741
        %744 = vst.msk [vmem:[#allocation3] sm:$0xff] %vm742, %v713
        // Predicated region
        $region49: #{tpu_custom_call.1} parent=31 // pred_check
          %p745 = pneg %p239
        $region50: #{tpu_custom_call.1} parent=31 // pred_check_branch
          %747 = sbr.rel (%p745) target = $region52
        $region51: #{tpu_custom_call.1} parent=31 // pred_region
          %v748 = vld [vmem:[#allocation3] sm:$0xff]
          %v749 = vld [vmem:[#allocation4] sm:$0xff]
          %v750 = vlog2.pop %v749
          %v751 = vmul.f32 %v750, 0.6931472
          %v752 = vadd.f32 %v748, %v751
          %v753 = vld [vmem:[%s235] sm:$0xff]
          %v754 = vld [vmem:[%s235 + $0x8] sm:$0xff]
          %v755 = vld [vmem:[%s235 + $0x10] sm:$0xff]
          %v756 = vld [vmem:[%s235 + $0x18] sm:$0xff]
          %758 = vset.pattern.permute.xlu0 0
          %759 = vperm.xlu0 %758, %v752
          %v760 = vpop.permute.xlu0 %759
          %v762 = vsub.f32 %v753, %v760
          %v763 = vsub.f32 %v754, %v760
          %v764 = vsub.f32 %v755, %v760
          %v765 = vsub.f32 %v756, %v760
          %766 = vst [vmem:[%s235] sm:$0xff] %v762
          %767 = vst [vmem:[%s235 + $0x8] sm:$0xff] %v763
          %768 = vst [vmem:[%s235 + $0x10] sm:$0xff] %v764
          %769 = vst [vmem:[%s235 + $0x18] sm:$0xff] %v765
        $region52: #{tpu_custom_call.1} parent=31 // pred_fallthru
          _
        %s770 = sand.u32 %s114, 1
        %s771 = scalar_lea.sflag [#allocation7], %s770
        %s772 = sand.u32 %s114, 1
        %s773 = smul.addr %s772, 32
        %s774 = scalar_lea.vmem [#allocation11], %s773
        // Predicated region
        $region53: #{tpu_custom_call.1} parent=31 // pred_check
          %p775 = pneg %p124
        $region54: #{tpu_custom_call.1} parent=31 // pred_check_branch
          %777 = sbr.rel (%p775) target = $region56
        $region55: #{tpu_custom_call.1} parent=31 // pred_region
          %s779 = ssub.s32 512, 512
          %780 = vsyncadd %s771, %s779
          %s781 = smul.addr %s25, 4
          %s782 = smul.addr %s781, 128
          %s783 = scalar_lea.hbm %s3, %s782
          %s785 = sshll.u32 %s774, 4
          %s786 = int_to_ptr.vmem [resolvable:$true] %s785
          %788 = dma.vmem_to_hbm [thread:$0]  %s786, 512, %s783, %s771
        $region56: #{tpu_custom_call.1} parent=31 // pred_fallthru
          _
      $region32: #{tpu_custom_call.1} parent=5 // pred_fallthru
        _
      %p789 = scmp.le.s32.totalorder 2, %s16
      // Predicated region
      $region57: #{tpu_custom_call.1} parent=5 // pred_check
        %p790 = pneg %p789
      $region58: #{tpu_custom_call.1} parent=5 // pred_check_branch
        %792 = sbr.rel (%p790) target = $region60
      $region59: #{tpu_custom_call.1} parent=5 // pred_region
        %s793 = ssub.s32 %s16, 2
        // Predicated region
        $region61: #{tpu_custom_call.1} parent=59 // pred_check
          %p794 = pneg %p130
        $region62: #{tpu_custom_call.1} parent=59 // pred_check_branch
          %796 = sbr.rel (%p794) target = $region64
        $region63: #{tpu_custom_call.1} parent=59 // pred_region
          %s797 = sand.u32 %s115, 1
          %s798 = scalar_lea.sflag [#allocation7], %s797
          %s799 = sand.u32 %s115, 1
          %s800 = smul.addr %s799, 32
          %s801 = scalar_lea.vmem [#allocation11], %s800
          %802 = dma.done %s798, 512
        $region64: #{tpu_custom_call.1} parent=59 // pred_fallthru
          _
      $region60: #{tpu_custom_call.1} parent=5 // pred_fallthru
        _
    $region6: #{tpu_custom_call.1} parent=1 // loop_footer
      %s20 = sadd.s32 1, %s16
    $region7: #{tpu_custom_call.1} parent=1 // loop_footer_branch
      %15 = sbr.rel target = $region3
    $region8: #{tpu_custom_call.1} parent=1 // loop_exit
      _
    %803 = vsyncpa [#allocation6], 1
    %s804 = scalar_lea.sflag [#allocation6], 1
    %805 = vsyncpa %s804, 1
    %806 = vsyncpa [#allocation9], 1
    %807 = vsyncpa [#allocation7], 1
    %s808 = scalar_lea.sflag [#allocation7], 1
    %809 = vsyncpa %s808, 1

</llo_original>
